<compile_context>
chip_gen: v7x
topology: tpu7x:2x2x1
jax: 0.10.0
libtpu: 0.0.40
codegen_flags: <defaults>
</compile_context>

<pallas_src>
import jax
import jax.numpy as jnp
from jax.experimental import pallas as pl
from jax.experimental.pallas import tpu as pltpu

HIDDEN = 256
BN_EPS = 1e-5


def _batchnorm(h, gamma, beta):
    # Training-mode BatchNorm1d in fused scale/shift form:
    #   s = gamma * rsqrt(var + eps), t = beta - mu * s, out = h * s + t
    mu = jnp.mean(h, axis=0, keepdims=True)
    ex2 = jnp.mean(h * h, axis=0, keepdims=True)
    var = jnp.maximum(ex2 - mu * mu, 0.0)          # biased variance (PyTorch training mode)
    s = gamma * jax.lax.rsqrt(var + BN_EPS)
    t = beta - mu * s
    return h * s + t


def pi_network_kernel(x_ref, w1_ref, w2_ref, w3_ref,
                      bn0_ref, hid_ref, b3_ref, o_ref):
    x = x_ref[...].astype(jnp.float32)             # (B, in_dim)

    bn0 = bn0_ref[...]                             # (2, in_dim): [gamma0, beta0]
    hid = hid_ref[...]                             # (6, HIDDEN): [b1, g1, be1, b2, g2, be2]
    g0, be0 = bn0[0:1, :], bn0[1:2, :]
    b1, g1, be1 = hid[0:1, :], hid[1:2, :], hid[2:3, :]
    b2, g2, be2 = hid[3:4, :], hid[4:5, :], hid[5:6, :]

    # bn0(state)
    x = _batchnorm(x, g0, be0)

    # relu(bn1(fc1(x)))  -- bf16 MXU inputs, f32 accumulation, f32 BN
    h1 = jnp.dot(x.astype(jnp.bfloat16), w1_ref[...],
                 preferred_element_type=jnp.float32) + b1
    h1 = jnp.maximum(_batchnorm(h1, g1, be1), 0.0)

    # relu(bn2(fc2(x)))
    h2 = jnp.dot(h1.astype(jnp.bfloat16), w2_ref[...],
                 preferred_element_type=jnp.float32) + b2
    h2 = jnp.maximum(_batchnorm(h2, g2, be2), 0.0)

    # tanh(fc3(x))
    h3 = jnp.dot(h2.astype(jnp.bfloat16), w3_ref[...],
                 preferred_element_type=jnp.float32) + b3_ref[...]
    o_ref[...] = jnp.tanh(h3).astype(o_ref.dtype)


@jax.jit
def pi_network_forward(state, params):
    """state: (B, in_dim) float32; params: dict of weights (see init_params)."""
    B, _ = state.shape
    out_dim = params["w3"].shape[1]

    # bf16 weights (halves weight HBM traffic; f32 accumulation in-kernel).
    w1 = params["w1"].astype(jnp.bfloat16)
    w2 = params["w2"].astype(jnp.bfloat16)
    w3 = params["w3"].astype(jnp.bfloat16)

    # Pack tiny per-feature params into slabs to cut operand / DMA-descriptor count.
    bn0 = jnp.concatenate([params["g0"], params["be0"]], axis=0)            # (2, in_dim)
    hid = jnp.concatenate([params["b1"], params["g1"], params["be1"],
                           params["b2"], params["g2"], params["be2"]], axis=0)  # (6, HIDDEN)
    b3 = params["b3"]                                                        # (1, out_dim)

    args = (state.astype(jnp.float32), w1, w2, w3, bn0, hid, b3)

    vmem = pltpu.MemorySpace.VMEM
    return pl.pallas_call(
        pi_network_kernel,
        out_shape=jax.ShapeDtypeStruct((B, out_dim), jnp.float32),
        in_specs=[pl.BlockSpec(memory_space=vmem) for _ in args],
        out_specs=pl.BlockSpec(memory_space=vmem),
    )(*args)


def init_params(key, in_dim, out_dim):
    """Deterministic synthetic init mirroring the PyTorch _init() ranges."""
    ks = jax.random.split(key, 6)
    lim1 = 1.0 / jnp.sqrt(jnp.float32(HIDDEN))   # hidden_init uses weight.size()[0] == out_features
    lim2 = 1.0 / jnp.sqrt(jnp.float32(HIDDEN))
    return {
        # Linear weights stored pre-transposed as (in, out) for x @ W.
        "w1": jax.random.uniform(ks[0], (in_dim, HIDDEN), jnp.float32, -lim1, lim1),
        "b1": jax.random.uniform(ks[1], (1, HIDDEN), jnp.float32, -lim1, lim1),
        "w2": jax.random.uniform(ks[2], (HIDDEN, HIDDEN), jnp.float32, -lim2, lim2),
        "b2": jax.random.uniform(ks[3], (1, HIDDEN), jnp.float32, -lim2, lim2),
        "w3": jax.random.uniform(ks[4], (HIDDEN, out_dim), jnp.float32, -0.003, 0.003),
        "b3": jax.random.uniform(ks[5], (1, out_dim), jnp.float32, -0.003, 0.003),
        # BatchNorm1d affine params (PyTorch default: weight=1, bias=0).
        "g0": jnp.ones((1, in_dim), jnp.float32),
        "be0": jnp.zeros((1, in_dim), jnp.float32),
        "g1": jnp.ones((1, HIDDEN), jnp.float32),
        "be1": jnp.zeros((1, HIDDEN), jnp.float32),
        "g2": jnp.ones((1, HIDDEN), jnp.float32),
        "be2": jnp.zeros((1, HIDDEN), jnp.float32),
    }


def _reference_forward(state, p, mm_dtype=jnp.float32):
    """Pure-JAX reference (training-mode BN). mm_dtype=bf16 mirrors the kernel's matmul casts."""
    def bn(h, g, b):
        mu = jnp.mean(h, axis=0, keepdims=True)
        var = jnp.mean((h - mu) ** 2, axis=0, keepdims=True)
        return (h - mu) / jnp.sqrt(var + BN_EPS) * g + b

    def mm(a, w):
        return jnp.dot(a.astype(mm_dtype), w.astype(mm_dtype),
                       preferred_element_type=jnp.float32)

    x = bn(state, p["g0"], p["be0"])
    h1 = jnp.maximum(bn(mm(x, p["w1"]) + p["b1"], p["g1"], p["be1"]), 0.0)
    h2 = jnp.maximum(bn(mm(h1, p["w2"]) + p["b2"], p["g2"], p["be2"]), 0.0)
    return jnp.tanh(mm(h2, p["w3"]) + p["b3"])


if __name__ == "__main__":
    key = jax.random.PRNGKey(0)
    B, IN_DIM, OUT_DIM = 8, 24, 4   # Reacher-like: small state, 4-dim action

    k_state, k_params = jax.random.split(key)
    state = jax.random.normal(k_state, (B, IN_DIM), jnp.float32)
    params = init_params(k_params, IN_DIM, OUT_DIM)

    out = pi_network_forward(state, params)
    out = jax.block_until_ready(out)
    assert out.shape == (B, OUT_DIM)

    # Mirror reference (same bf16 matmul-input casts as the kernel): tight tolerance.
    ref_bf16 = _reference_forward(state, params, mm_dtype=jnp.bfloat16)
    assert jnp.allclose(out, ref_bf16, atol=1e-4, rtol=1e-4), \
        f"max abs diff vs bf16-mirror ref: {jnp.max(jnp.abs(out - ref_bf16))}"

    # Full-f32 reference (PyTorch-semantics ground truth): loose tolerance for bf16 matmul inputs.
    ref_f32 = _reference_forward(state, params, mm_dtype=jnp.float32)
    assert jnp.allclose(out, ref_f32, atol=5e-3, rtol=5e-2), \
        f"max abs diff vs f32 ref: {jnp.max(jnp.abs(out - ref_f32))}"

    print("KERNEL_OK")
</pallas_src>

<mosaic_0001>
module attributes {stable_mosaic.version = 11 : i64} {
  func.func @pi_network_kernel(%arg0: memref<8x24xf32, #tpu.memory_space<vmem>>, %arg1: memref<24x256xbf16, #tpu.memory_space<vmem>>, %arg2: memref<256x256xbf16, #tpu.memory_space<vmem>>, %arg3: memref<256x4xbf16, #tpu.memory_space<vmem>>, %arg4: memref<2x24xf32, #tpu.memory_space<vmem>>, %arg5: memref<6x256xf32, #tpu.memory_space<vmem>>, %arg6: memref<1x4xf32, #tpu.memory_space<vmem>>, %arg7: memref<8x4xf32, #tpu.memory_space<vmem>>) attributes {dimension_semantics = [], scalar_prefetch = 0 : i64, scratch_operands = 0 : i64, tpu.core_type = #tpu.core_type<tc>} {
    %c0 = arith.constant 0 : index
    %c0_0 = arith.constant 0 : index
    %0 = vector.load %arg0[%c0, %c0_0] : memref<8x24xf32, #tpu.memory_space<vmem>>, vector<8x24xf32>
    %c0_1 = arith.constant 0 : index
    %c0_2 = arith.constant 0 : index
    %1 = vector.load %arg4[%c0_1, %c0_2] : memref<2x24xf32, #tpu.memory_space<vmem>>, vector<2x24xf32>
    %c0_3 = arith.constant 0 : index
    %c0_4 = arith.constant 0 : index
    %2 = vector.load %arg5[%c0_3, %c0_4] : memref<6x256xf32, #tpu.memory_space<vmem>>, vector<6x256xf32>
    %3 = vector.extract_strided_slice %1 {offsets = [0, 0], sizes = [1, 24], strides = [1, 1]} : vector<2x24xf32> to vector<1x24xf32>
    %4 = vector.extract_strided_slice %1 {offsets = [1, 0], sizes = [1, 24], strides = [1, 1]} : vector<2x24xf32> to vector<1x24xf32>
    %5 = vector.extract_strided_slice %2 {offsets = [0, 0], sizes = [1, 256], strides = [1, 1]} : vector<6x256xf32> to vector<1x256xf32>
    %6 = vector.extract_strided_slice %2 {offsets = [1, 0], sizes = [1, 256], strides = [1, 1]} : vector<6x256xf32> to vector<1x256xf32>
    %7 = vector.extract_strided_slice %2 {offsets = [2, 0], sizes = [1, 256], strides = [1, 1]} : vector<6x256xf32> to vector<1x256xf32>
    %8 = vector.extract_strided_slice %2 {offsets = [3, 0], sizes = [1, 256], strides = [1, 1]} : vector<6x256xf32> to vector<1x256xf32>
    %9 = vector.extract_strided_slice %2 {offsets = [4, 0], sizes = [1, 256], strides = [1, 1]} : vector<6x256xf32> to vector<1x256xf32>
    %10 = vector.extract_strided_slice %2 {offsets = [5, 0], sizes = [1, 256], strides = [1, 1]} : vector<6x256xf32> to vector<1x256xf32>
    %cst = arith.constant dense<0.000000e+00> : vector<24xf32>
    %11 = vector.multi_reduction <add>, %0, %cst [0] : vector<8x24xf32> to vector<24xf32>
    %12 = vector.shape_cast %11 : vector<24xf32> to vector<1x24xf32>
    %cst_5 = arith.constant 8.000000e+00 : f32
    %13 = vector.broadcast %cst_5 : f32 to vector<1x24xf32>
    %14 = arith.divf %12, %13 : vector<1x24xf32>
    %15 = arith.mulf %0, %0 : vector<8x24xf32>
    %cst_6 = arith.constant dense<0.000000e+00> : vector<24xf32>
    %16 = vector.multi_reduction <add>, %15, %cst_6 [0] : vector<8x24xf32> to vector<24xf32>
    %17 = vector.shape_cast %16 : vector<24xf32> to vector<1x24xf32>
    %cst_7 = arith.constant 8.000000e+00 : f32
    %18 = vector.broadcast %cst_7 : f32 to vector<1x24xf32>
    %19 = arith.divf %17, %18 : vector<1x24xf32>
    %20 = arith.mulf %14, %14 : vector<1x24xf32>
    %21 = arith.subf %19, %20 : vector<1x24xf32>
    %cst_8 = arith.constant 0.000000e+00 : f32
    %22 = vector.broadcast %cst_8 : f32 to vector<1x24xf32>
    %23 = arith.maximumf %21, %22 : vector<1x24xf32>
    %cst_9 = arith.constant 9.99999974E-6 : f32
    %24 = vector.broadcast %cst_9 : f32 to vector<1x24xf32>
    %25 = arith.addf %23, %24 : vector<1x24xf32>
    %26 = math.rsqrt %25 : vector<1x24xf32>
    %27 = arith.mulf %3, %26 : vector<1x24xf32>
    %28 = arith.mulf %14, %27 : vector<1x24xf32>
    %29 = arith.subf %4, %28 : vector<1x24xf32>
    %30 = vector.broadcast %27 : vector<1x24xf32> to vector<8x24xf32>
    %31 = arith.mulf %0, %30 : vector<8x24xf32>
    %32 = vector.broadcast %29 : vector<1x24xf32> to vector<8x24xf32>
    %33 = arith.addf %31, %32 : vector<8x24xf32>
    %34 = arith.truncf %33 : vector<8x24xf32> to vector<8x24xbf16>
    %c0_10 = arith.constant 0 : index
    %c0_11 = arith.constant 0 : index
    %35 = vector.load %arg1[%c0_10, %c0_11] : memref<24x256xbf16, #tpu.memory_space<vmem>>, vector<24x256xbf16>
    %cst_12 = arith.constant dense<0.000000e+00> : vector<8x256xf32>
    %36 = tpu.matmul %34, %35, %cst_12 {dimension_numbers = #tpu.dot_dimension_numbers<[1], [0], [0], [1], [0, 0, 1, 1], [], []>} : vector<8x24xbf16>, vector<24x256xbf16>, vector<8x256xf32> -> vector<8x256xf32>
    %37 = vector.broadcast %5 : vector<1x256xf32> to vector<8x256xf32>
    %38 = arith.addf %36, %37 : vector<8x256xf32>
    %cst_13 = arith.constant dense<0.000000e+00> : vector<256xf32>
    %39 = vector.multi_reduction <add>, %38, %cst_13 [0] : vector<8x256xf32> to vector<256xf32>
    %40 = vector.shape_cast %39 : vector<256xf32> to vector<1x256xf32>
    %cst_14 = arith.constant 8.000000e+00 : f32
    %41 = vector.broadcast %cst_14 : f32 to vector<1x256xf32>
    %42 = arith.divf %40, %41 : vector<1x256xf32>
    %43 = arith.mulf %38, %38 : vector<8x256xf32>
    %cst_15 = arith.constant dense<0.000000e+00> : vector<256xf32>
    %44 = vector.multi_reduction <add>, %43, %cst_15 [0] : vector<8x256xf32> to vector<256xf32>
    %45 = vector.shape_cast %44 : vector<256xf32> to vector<1x256xf32>
    %cst_16 = arith.constant 8.000000e+00 : f32
    %46 = vector.broadcast %cst_16 : f32 to vector<1x256xf32>
    %47 = arith.divf %45, %46 : vector<1x256xf32>
    %48 = arith.mulf %42, %42 : vector<1x256xf32>
    %49 = arith.subf %47, %48 : vector<1x256xf32>
    %cst_17 = arith.constant 0.000000e+00 : f32
    %50 = vector.broadcast %cst_17 : f32 to vector<1x256xf32>
    %51 = arith.maximumf %49, %50 : vector<1x256xf32>
    %cst_18 = arith.constant 9.99999974E-6 : f32
    %52 = vector.broadcast %cst_18 : f32 to vector<1x256xf32>
    %53 = arith.addf %51, %52 : vector<1x256xf32>
    %54 = math.rsqrt %53 : vector<1x256xf32>
    %55 = arith.mulf %6, %54 : vector<1x256xf32>
    %56 = arith.mulf %42, %55 : vector<1x256xf32>
    %57 = arith.subf %7, %56 : vector<1x256xf32>
    %58 = vector.broadcast %55 : vector<1x256xf32> to vector<8x256xf32>
    %59 = arith.mulf %38, %58 : vector<8x256xf32>
    %60 = vector.broadcast %57 : vector<1x256xf32> to vector<8x256xf32>
    %61 = arith.addf %59, %60 : vector<8x256xf32>
    %cst_19 = arith.constant 0.000000e+00 : f32
    %62 = vector.broadcast %cst_19 : f32 to vector<8x256xf32>
    %63 = arith.maximumf %61, %62 : vector<8x256xf32>
    %64 = arith.truncf %63 : vector<8x256xf32> to vector<8x256xbf16>
    %c0_20 = arith.constant 0 : index
    %c0_21 = arith.constant 0 : index
    %65 = vector.load %arg2[%c0_20, %c0_21] : memref<256x256xbf16, #tpu.memory_space<vmem>>, vector<256x256xbf16>
    %cst_22 = arith.constant dense<0.000000e+00> : vector<8x256xf32>
    %66 = tpu.matmul %64, %65, %cst_22 {dimension_numbers = #tpu.dot_dimension_numbers<[1], [0], [0], [1], [0, 0, 1, 1], [], []>} : vector<8x256xbf16>, vector<256x256xbf16>, vector<8x256xf32> -> vector<8x256xf32>
    %67 = vector.broadcast %8 : vector<1x256xf32> to vector<8x256xf32>
    %68 = arith.addf %66, %67 : vector<8x256xf32>
    %cst_23 = arith.constant dense<0.000000e+00> : vector<256xf32>
    %69 = vector.multi_reduction <add>, %68, %cst_23 [0] : vector<8x256xf32> to vector<256xf32>
    %70 = vector.shape_cast %69 : vector<256xf32> to vector<1x256xf32>
    %cst_24 = arith.constant 8.000000e+00 : f32
    %71 = vector.broadcast %cst_24 : f32 to vector<1x256xf32>
    %72 = arith.divf %70, %71 : vector<1x256xf32>
    %73 = arith.mulf %68, %68 : vector<8x256xf32>
    %cst_25 = arith.constant dense<0.000000e+00> : vector<256xf32>
    %74 = vector.multi_reduction <add>, %73, %cst_25 [0] : vector<8x256xf32> to vector<256xf32>
    %75 = vector.shape_cast %74 : vector<256xf32> to vector<1x256xf32>
    %cst_26 = arith.constant 8.000000e+00 : f32
    %76 = vector.broadcast %cst_26 : f32 to vector<1x256xf32>
    %77 = arith.divf %75, %76 : vector<1x256xf32>
    %78 = arith.mulf %72, %72 : vector<1x256xf32>
    %79 = arith.subf %77, %78 : vector<1x256xf32>
    %cst_27 = arith.constant 0.000000e+00 : f32
    %80 = vector.broadcast %cst_27 : f32 to vector<1x256xf32>
    %81 = arith.maximumf %79, %80 : vector<1x256xf32>
    %cst_28 = arith.constant 9.99999974E-6 : f32
    %82 = vector.broadcast %cst_28 : f32 to vector<1x256xf32>
    %83 = arith.addf %81, %82 : vector<1x256xf32>
    %84 = math.rsqrt %83 : vector<1x256xf32>
    %85 = arith.mulf %9, %84 : vector<1x256xf32>
    %86 = arith.mulf %72, %85 : vector<1x256xf32>
    %87 = arith.subf %10, %86 : vector<1x256xf32>
    %88 = vector.broadcast %85 : vector<1x256xf32> to vector<8x256xf32>
    %89 = arith.mulf %68, %88 : vector<8x256xf32>
    %90 = vector.broadcast %87 : vector<1x256xf32> to vector<8x256xf32>
    %91 = arith.addf %89, %90 : vector<8x256xf32>
    %cst_29 = arith.constant 0.000000e+00 : f32
    %92 = vector.broadcast %cst_29 : f32 to vector<8x256xf32>
    %93 = arith.maximumf %91, %92 : vector<8x256xf32>
    %94 = arith.truncf %93 : vector<8x256xf32> to vector<8x256xbf16>
    %c0_30 = arith.constant 0 : index
    %c0_31 = arith.constant 0 : index
    %95 = vector.load %arg3[%c0_30, %c0_31] : memref<256x4xbf16, #tpu.memory_space<vmem>>, vector<256x4xbf16>
    %cst_32 = arith.constant dense<0.000000e+00> : vector<8x4xf32>
    %96 = tpu.matmul %94, %95, %cst_32 {dimension_numbers = #tpu.dot_dimension_numbers<[1], [0], [0], [1], [0, 0, 1, 1], [], []>} : vector<8x256xbf16>, vector<256x4xbf16>, vector<8x4xf32> -> vector<8x4xf32>
    %c0_33 = arith.constant 0 : index
    %c0_34 = arith.constant 0 : index
    %97 = vector.load %arg6[%c0_33, %c0_34] : memref<1x4xf32, #tpu.memory_space<vmem>>, vector<1x4xf32>
    %98 = vector.broadcast %97 : vector<1x4xf32> to vector<8x4xf32>
    %99 = arith.addf %96, %98 : vector<8x4xf32>
    %100 = math.tanh %99 : vector<8x4xf32>
    %c0_35 = arith.constant 0 : index
    %c0_36 = arith.constant 0 : index
    %101 = vector.load %arg7[%c0_35, %c0_36] : memref<8x4xf32, #tpu.memory_space<vmem>>, vector<8x4xf32>
    tpu.vector_store %arg7[%c0_35, %c0_36], %100 {strides = array<i32>} : memref<8x4xf32, #tpu.memory_space<vmem>>, vector<8x4xf32>,
    return
  }
}

</mosaic_0001>

<llo_original>
// kernel: pi_network_forward.1
$region0: #{pi_network_forward.1}
  #allocation0 [shape = 'u32[]', space=smem, size = 0x4, offset = 0x4, fixed_abs, tag = 'smem constant byte address 0x4 - core index']
  #allocation1 [shape = 'u32[144,128]{1,0:T(1,128)}', space=vmem, size = 0x12000, scoped, tag = 'internal scratch']
  %s0 = inlined_call_operand.vmem [shape: f32[8,24], index: 0, kind: input, shape index: {}]
  %s1 = inlined_call_operand.vmem [shape: bf16[24,256], index: 1, kind: input, shape index: {}]
  %s2 = inlined_call_operand.vmem [shape: bf16[256,256], index: 2, kind: input, shape index: {}]
  %s3 = inlined_call_operand.vmem [shape: bf16[256,4], index: 3, kind: input, shape index: {}]
  %s4 = inlined_call_operand.vmem [shape: f32[2,24], index: 4, kind: input, shape index: {}]
  %s5 = inlined_call_operand.vmem [shape: f32[6,256], index: 5, kind: input, shape index: {}]
  %s6 = inlined_call_operand.vmem [shape: f32[1,4], index: 6, kind: input, shape index: {}]
  %s7 = inlined_call_operand.vmem [shape: f32[8,4], index: 7, kind: output, shape index: {}]
  %s8 = sld [smem:[#allocation0]]
  $region38: #{pi_network_forward.1} parent=0
    _
  %s10 = ssub.s32 1, %s8
  %s11 = scalar_select 0, %s10, %s8
  // Predicated region
  $region2: #{pi_network_forward.1} parent=0 // pred_check
    _
  $region3: #{pi_network_forward.1} parent=0 // pred_check_branch
    %13 = sbr.rel (0) target = $region5
  $region4: #{pi_network_forward.1} parent=0 // pred_region
    _
  $region5: #{pi_network_forward.1} parent=0 // pred_fallthru
    _
  // Predicated region
  $region6: #{pi_network_forward.1} parent=0 // pred_check
    _
  $region7: #{pi_network_forward.1} parent=0 // pred_check_branch
    %15 = sbr.rel (0) target = $region9
  $region8: #{pi_network_forward.1} parent=0 // pred_region
    _
  $region9: #{pi_network_forward.1} parent=0 // pred_fallthru
    _
  // Predicated region
  $region10: #{pi_network_forward.1} parent=0 // pred_check
    _
  $region11: #{pi_network_forward.1} parent=0 // pred_check_branch
    %17 = sbr.rel (0) target = $region13
  $region12: #{pi_network_forward.1} parent=0 // pred_region
    _
  $region13: #{pi_network_forward.1} parent=0 // pred_fallthru
    _
  // Predicated region
  $region14: #{pi_network_forward.1} parent=0 // pred_check
    _
  $region15: #{pi_network_forward.1} parent=0 // pred_check_branch
    %19 = sbr.rel (0) target = $region17
  $region16: #{pi_network_forward.1} parent=0 // pred_region
    _
  $region17: #{pi_network_forward.1} parent=0 // pred_fallthru
    _
  // Predicated region
  $region18: #{pi_network_forward.1} parent=0 // pred_check
    _
  $region19: #{pi_network_forward.1} parent=0 // pred_check_branch
    %21 = sbr.rel (0) target = $region21
  $region20: #{pi_network_forward.1} parent=0 // pred_region
    _
  $region21: #{pi_network_forward.1} parent=0 // pred_fallthru
    _
  // Predicated region
  $region22: #{pi_network_forward.1} parent=0 // pred_check
    _
  $region23: #{pi_network_forward.1} parent=0 // pred_check_branch
    %23 = sbr.rel (0) target = $region25
  $region24: #{pi_network_forward.1} parent=0 // pred_region
    _
  $region25: #{pi_network_forward.1} parent=0 // pred_fallthru
    _
  // Predicated region
  $region26: #{pi_network_forward.1} parent=0 // pred_check
    _
  $region27: #{pi_network_forward.1} parent=0 // pred_check_branch
    %25 = sbr.rel (0) target = $region29
  $region28: #{pi_network_forward.1} parent=0 // pred_region
    _
  $region29: #{pi_network_forward.1} parent=0 // pred_fallthru
    _
  %v27 = vld [vmem:[%s0] sm:$0xff]
  %v28 = vld [vmem:[%s4] sm:$0x3]
  %v29 = vld [vmem:[%s5] sm:$0x3f]
  %v30 = vld [vmem:[%s5 + $0x8] sm:$0x3f]
  %vm31 = vcmask 195584
  %v32 = vsel %vm31, %v27, 0.0
  %v33 = vrot.slane %v32, 4
  %v34 = vadd.f32 %v32, %v33
  %v35 = vrot.slane %v34, 2
  %v36 = vadd.f32 %v34, %v35
  %v37 = vrot.slane %v36, 1
  %v38 = vadd.f32 %v36, %v37
  %v39 = vrcp.pop 8.0
  %v40 = vmul.f32 %v38, %v39
  %v41 = vmul.f32 %v27, %v27
  %v42 = vsel %vm31, %v41, 0.0
  %v43 = vrot.slane %v42, 4
  %v44 = vadd.f32 %v42, %v43
  %v45 = vrot.slane %v44, 2
  %v46 = vadd.f32 %v44, %v45
  %v47 = vrot.slane %v46, 1
  %v48 = vadd.f32 %v46, %v47
  %v49 = vmul.f32 %v48, %v39
  %v50 = vmul.f32 %v40, %v40
  %v51 = vsub.f32 %v49, %v50
  %v52 = vmax.f32 %v51, 0.0
  %v53 = vadd.f32 %v52, 1e-05
  %v54 = vrsqrt.pop %v53
  %v55 = vmul.f32 %v28, %v54
  %v56 = vmul.f32 %v40, %v55
  %v58 = vrot.slane %v56, 7
  %v60 = vsub.f32 %v28, %v58
  %v61 = vlaneseq
  %v62 = vshrl.u32 %v61, 7
  %v63 = vsub.s32 0, %v62
  %v64 = vrot.slane %v55, %v63
  %v65 = vmul.f32 %v27, %v64
  %v66 = vlaneseq
  %v67 = vshrl.u32 %v66, 7
  %v68 = vsub.s32 1, %v67
  %v69 = vrot.slane %v60, %v68
  %v70 = vadd.f32 %v65, %v69
  %v71 = vpack.c.bf16 %v70, %v70
  %v72 = vld [vmem:[%s1] sm:$0xff]
  %v73 = vld [vmem:[%s1 + $0x8] sm:$0xff]
  %v74 = vld [vmem:[%s1 + $0x10] sm:$0xff]
  %v75 = vlaneseq
  %v76 = vshrl.u32 %v75, 7
  %v77 = vsub.s32 0, %v76
  %v78 = vrot.slane %v29, %v77
  %v79 = vlaneseq
  %v80 = vshrl.u32 %v79, 7
  %v81 = vsub.s32 0, %v80
  %v82 = vrot.slane %v30, %v81
  %v86 = vunpack.c.l.b16 %v72
  %v87 = vunpack.c.h.b16 %v72
  %v88 = vunpack.c.l.b16 %v73
  %v89 = vunpack.c.h.b16 %v73
  %v90 = vunpack.c.l.b16 %v74
  %v91 = vunpack.c.h.b16 %v74
  %v92 = vpack.c.b16 %v88, %v86
  %v93 = vpack.c.b16 %v89, %v87
  %v94 = vpack.c.b16 %v90, %v90
  %v95 = vpack.c.b16 %v91, %v91
  %v99 = vsel %vm31, %v71, 0
  %vm101 = vcmask 1043456
  %v103 = vsel %vm101, %v94, 0
  %v106 = vsel %vm101, %v95, 0
  %108 = vmatprep.subr.bf16.mxu0 %v93
  %109 = vmatpush1.bf16.msra.mxu0 %v92
  %110 = vmatprep.subr.bf16.mxu0 %v106
  %111 = vmatpush1.bf16.msra.mxu0 %v103
  %112 = vmatprep.subr.bf16.mxu0 0
  %113 = vmatpush1.bf16.msra.mxu0 0
  %114 = vmatprep.subr.bf16.mxu0 0
  %115 = vmatpush1.bf16.msra.mxu0 0
  %116 = vmatprep.subr.bf16.mxu0 0
  %117 = vmatpush1.bf16.msra.mxu0 0
  %118 = vmatprep.subr.bf16.mxu0 0
  %119 = vmatpush1.bf16.msra.mxu0 0
  %120 = vmatprep.subr.bf16.mxu0 0
  %121 = vmatpush1.bf16.msra.mxu0 0
  %122 = vmatprep.subr.bf16.mxu0 0
  %123 = vmatpush1.bf16.msra.mxu0 0
  %124 = vmatprep.subr.bf16.mxu0 0
  %125 = vmatpush1.bf16.msra.mxu0 0
  %126 = vmatprep.subr.bf16.mxu0 0
  %127 = vmatpush1.bf16.msra.mxu0 0
  %128 = vmatprep.subr.bf16.mxu0 0
  %129 = vmatpush1.bf16.msra.mxu0 0
  %130 = vmatprep.subr.bf16.mxu0 0
  %131 = vmatpush1.bf16.msra.mxu0 0
  %132 = vmatprep.subr.bf16.mxu0 0
  %133 = vmatpush1.bf16.msra.mxu0 0
  %134 = vmatprep.subr.bf16.mxu0 0
  %135 = vmatpush1.bf16.msra.mxu0 0
  %136 = vmatprep.subr.bf16.mxu0 0
  %137 = vmatpush1.bf16.msra.mxu0 0
  %138 = vmatprep.subr.bf16.mxu0 0
  %139 = vmatpush1.bf16.msra.mxu0 0
  %140 = vmatprep.mubr.bf16.mxu0 0
  %141 = vmatmul.mubr.bf16.gmra.mrb[0].mxu0 %v99
  %v142 = vpop.f32.mrb[0].mxu0
  %v143 = vadd.f32 %v78, %v142
  %v144 = vpop.f32.mrb[0].mxu0
  %v145 = vadd.f32 %v82, %v144
  %v146 = vpop.f32.mrb[0].mxu0
  %v147 = vpop.f32.mrb[0].mxu0
  %148 = vdwg.mxu0
  %v149 = vrot.slane %v143, 4
  %v150 = vadd.f32 %v143, %v149
  %v151 = vrot.slane %v150, 2
  %v152 = vadd.f32 %v150, %v151
  %v153 = vrot.slane %v152, 1
  %v154 = vadd.f32 %v152, %v153
  %v155 = vrot.slane %v145, 4
  %v156 = vadd.f32 %v145, %v155
  %v157 = vrot.slane %v156, 2
  %v158 = vadd.f32 %v156, %v157
  %v159 = vrot.slane %v158, 1
  %v160 = vadd.f32 %v158, %v159
  %v161 = vmul.f32 %v154, %v39
  %v162 = vmul.f32 %v160, %v39
  %v163 = vmul.f32 %v143, %v143
  %v164 = vmul.f32 %v145, %v145
  %v165 = vrot.slane %v163, 4
  %v166 = vadd.f32 %v163, %v165
  %v167 = vrot.slane %v166, 2
  %v168 = vadd.f32 %v166, %v167
  %v169 = vrot.slane %v168, 1
  %v170 = vadd.f32 %v168, %v169
  %v171 = vrot.slane %v164, 4
  %v172 = vadd.f32 %v164, %v171
  %v173 = vrot.slane %v172, 2
  %v174 = vadd.f32 %v172, %v173
  %v175 = vrot.slane %v174, 1
  %v176 = vadd.f32 %v174, %v175
  %v177 = vmul.f32 %v170, %v39
  %v178 = vmul.f32 %v176, %v39
  %v179 = vmul.f32 %v161, %v161
  %v180 = vmul.f32 %v162, %v162
  %v181 = vsub.f32 %v177, %v179
  %v182 = vsub.f32 %v178, %v180
  %v183 = vmax.f32 %v181, 0.0
  %v184 = vmax.f32 %v182, 0.0
  %v185 = vadd.f32 %v183, 1e-05
  %v186 = vadd.f32 %v184, 1e-05
  %v187 = vrsqrt.pop %v185
  %v188 = vrsqrt.pop %v186
  %v189 = vmul.f32 %v29, %v187
  %v190 = vmul.f32 %v30, %v188
  %v191 = vmul.f32 %v161, %v189
  %v192 = vmul.f32 %v162, %v190
  %v195 = vrot.slane %v191, 7
  %v196 = vrot.slane %v192, 7
  %v199 = vsub.f32 %v29, %v195
  %v200 = vsub.f32 %v30, %v196
  %v201 = vlaneseq
  %v202 = vshrl.u32 %v201, 7
  %v203 = vsub.s32 1, %v202
  %v204 = vrot.slane %v189, %v203
  %v205 = vlaneseq
  %v206 = vshrl.u32 %v205, 7
  %v207 = vsub.s32 1, %v206
  %v208 = vrot.slane %v190, %v207
  %v209 = vmul.f32 %v143, %v204
  %v210 = vmul.f32 %v145, %v208
  %v211 = vlaneseq
  %v212 = vshrl.u32 %v211, 7
  %v213 = vsub.s32 2, %v212
  %v214 = vrot.slane %v199, %v213
  %v215 = vlaneseq
  %v216 = vshrl.u32 %v215, 7
  %v217 = vsub.s32 2, %v216
  %v218 = vrot.slane %v200, %v217
  %v219 = vadd.f32 %v209, %v214
  %v220 = vadd.f32 %v210, %v218
  %v221 = vmax.f32 %v219, 0.0
  %v222 = vmax.f32 %v220, 0.0
  %v223 = vpack.c.bf16 %v221, %v221
  %v224 = vpack.c.bf16 %v222, %v222
  %v225 = vld [vmem:[%s2] sm:$0xff]
  %v226 = vld [vmem:[%s2 + $0x8] sm:$0xff]
  %v227 = vld [vmem:[%s2 + $0x10] sm:$0xff]
  %v228 = vld [vmem:[%s2 + $0x18] sm:$0xff]
  %v229 = vld [vmem:[%s2 + $0x20] sm:$0xff]
  %v230 = vld [vmem:[%s2 + $0x28] sm:$0xff]
  %v231 = vld [vmem:[%s2 + $0x30] sm:$0xff]
  %v232 = vld [vmem:[%s2 + $0x38] sm:$0xff]
  %v233 = vld [vmem:[%s2 + $0x40] sm:$0xff]
  %v234 = vld [vmem:[%s2 + $0x48] sm:$0xff]
  %v235 = vld [vmem:[%s2 + $0x50] sm:$0xff]
  %v236 = vld [vmem:[%s2 + $0x58] sm:$0xff]
  %v237 = vld [vmem:[%s2 + $0x60] sm:$0xff]
  %v238 = vld [vmem:[%s2 + $0x68] sm:$0xff]
  %v239 = vld [vmem:[%s2 + $0x70] sm:$0xff]
  %v240 = vld [vmem:[%s2 + $0x78] sm:$0xff]
  %v241 = vld [vmem:[%s2 + $0x80] sm:$0xff]
  %v242 = vld [vmem:[%s2 + $0x88] sm:$0xff]
  %v243 = vld [vmem:[%s2 + $0x90] sm:$0xff]
  %v244 = vld [vmem:[%s2 + $0x98] sm:$0xff]
  %v245 = vld [vmem:[%s2 + $0xa0] sm:$0xff]
  %v246 = vld [vmem:[%s2 + $0xa8] sm:$0xff]
  %v247 = vld [vmem:[%s2 + $0xb0] sm:$0xff]
  %v248 = vld [vmem:[%s2 + $0xb8] sm:$0xff]
  %v249 = vld [vmem:[%s2 + $0xc0] sm:$0xff]
  %v250 = vld [vmem:[%s2 + $0xc8] sm:$0xff]
  %v251 = vld [vmem:[%s2 + $0xd0] sm:$0xff]
  %v252 = vld [vmem:[%s2 + $0xd8] sm:$0xff]
  %v253 = vld [vmem:[%s2 + $0xe0] sm:$0xff]
  %v254 = vld [vmem:[%s2 + $0xe8] sm:$0xff]
  %v255 = vld [vmem:[%s2 + $0xf0] sm:$0xff]
  %v256 = vld [vmem:[%s2 + $0xf8] sm:$0xff]
  %v257 = vlaneseq
  %v258 = vshrl.u32 %v257, 7
  %v259 = vsub.s32 3, %v258
  %v260 = vrot.slane %v29, %v259
  %v261 = vlaneseq
  %v262 = vshrl.u32 %v261, 7
  %v263 = vsub.s32 3, %v262
  %v264 = vrot.slane %v30, %v263
  %v297 = vunpack.c.l.b16 %v225
  %v298 = vunpack.c.h.b16 %v225
  %v299 = vunpack.c.l.b16 %v226
  %v300 = vunpack.c.h.b16 %v226
  %v301 = vunpack.c.l.b16 %v227
  %v302 = vunpack.c.h.b16 %v227
  %v303 = vunpack.c.l.b16 %v228
  %v304 = vunpack.c.h.b16 %v228
  %v305 = vunpack.c.l.b16 %v229
  %v306 = vunpack.c.h.b16 %v229
  %v307 = vunpack.c.l.b16 %v230
  %v308 = vunpack.c.h.b16 %v230
  %v309 = vunpack.c.l.b16 %v231
  %v310 = vunpack.c.h.b16 %v231
  %v311 = vunpack.c.l.b16 %v232
  %v312 = vunpack.c.h.b16 %v232
  %v313 = vunpack.c.l.b16 %v233
  %v314 = vunpack.c.h.b16 %v233
  %v315 = vunpack.c.l.b16 %v234
  %v316 = vunpack.c.h.b16 %v234
  %v317 = vunpack.c.l.b16 %v235
  %v318 = vunpack.c.h.b16 %v235
  %v319 = vunpack.c.l.b16 %v236
  %v320 = vunpack.c.h.b16 %v236
  %v321 = vunpack.c.l.b16 %v237
  %v322 = vunpack.c.h.b16 %v237
  %v323 = vunpack.c.l.b16 %v238
  %v324 = vunpack.c.h.b16 %v238
  %v325 = vunpack.c.l.b16 %v239
  %v326 = vunpack.c.h.b16 %v239
  %v327 = vunpack.c.l.b16 %v240
  %v328 = vunpack.c.h.b16 %v240
  %v329 = vunpack.c.l.b16 %v241
  %v330 = vunpack.c.h.b16 %v241
  %v331 = vunpack.c.l.b16 %v242
  %v332 = vunpack.c.h.b16 %v242
  %v333 = vunpack.c.l.b16 %v243
  %v334 = vunpack.c.h.b16 %v243
  %v335 = vunpack.c.l.b16 %v244
  %v336 = vunpack.c.h.b16 %v244
  %v337 = vunpack.c.l.b16 %v245
  %v338 = vunpack.c.h.b16 %v245
  %v339 = vunpack.c.l.b16 %v246
  %v340 = vunpack.c.h.b16 %v246
  %v341 = vunpack.c.l.b16 %v247
  %v342 = vunpack.c.h.b16 %v247
  %v343 = vunpack.c.l.b16 %v248
  %v344 = vunpack.c.h.b16 %v248
  %v345 = vunpack.c.l.b16 %v249
  %v346 = vunpack.c.h.b16 %v249
  %v347 = vunpack.c.l.b16 %v250
  %v348 = vunpack.c.h.b16 %v250
  %v349 = vunpack.c.l.b16 %v251
  %v350 = vunpack.c.h.b16 %v251
  %v351 = vunpack.c.l.b16 %v252
  %v352 = vunpack.c.h.b16 %v252
  %v353 = vunpack.c.l.b16 %v253
  %v354 = vunpack.c.h.b16 %v253
  %v355 = vunpack.c.l.b16 %v254
  %v356 = vunpack.c.h.b16 %v254
  %v357 = vunpack.c.l.b16 %v255
  %v358 = vunpack.c.h.b16 %v255
  %v359 = vunpack.c.l.b16 %v256
  %v360 = vunpack.c.h.b16 %v256
  %v361 = vpack.c.b16 %v299, %v297
  %v362 = vpack.c.b16 %v300, %v298
  %v363 = vpack.c.b16 %v303, %v301
  %v364 = vpack.c.b16 %v304, %v302
  %v365 = vpack.c.b16 %v307, %v305
  %v366 = vpack.c.b16 %v308, %v306
  %v367 = vpack.c.b16 %v311, %v309
  %v368 = vpack.c.b16 %v312, %v310
  %v369 = vpack.c.b16 %v315, %v313
  %v370 = vpack.c.b16 %v316, %v314
  %v371 = vpack.c.b16 %v319, %v317
  %v372 = vpack.c.b16 %v320, %v318
  %v373 = vpack.c.b16 %v323, %v321
  %v374 = vpack.c.b16 %v324, %v322
  %v375 = vpack.c.b16 %v327, %v325
  %v376 = vpack.c.b16 %v328, %v326
  %v377 = vpack.c.b16 %v331, %v329
  %v378 = vpack.c.b16 %v332, %v330
  %v379 = vpack.c.b16 %v335, %v333
  %v380 = vpack.c.b16 %v336, %v334
  %v381 = vpack.c.b16 %v339, %v337
  %v382 = vpack.c.b16 %v340, %v338
  %v383 = vpack.c.b16 %v343, %v341
  %v384 = vpack.c.b16 %v344, %v342
  %v385 = vpack.c.b16 %v347, %v345
  %v386 = vpack.c.b16 %v348, %v346
  %v387 = vpack.c.b16 %v351, %v349
  %v388 = vpack.c.b16 %v352, %v350
  %v389 = vpack.c.b16 %v355, %v353
  %v390 = vpack.c.b16 %v356, %v354
  %v391 = vpack.c.b16 %v359, %v357
  %v392 = vpack.c.b16 %v360, %v358
  %425 = vmatprep.subr.bf16.mxu0 %v362
  %426 = vmatpush1.bf16.msra.mxu0 %v361
  %427 = vmatprep.subr.bf16.mxu0 %v364
  %428 = vmatpush1.bf16.msra.mxu0 %v363
  %429 = vmatprep.subr.bf16.mxu0 %v366
  %430 = vmatpush1.bf16.msra.mxu0 %v365
  %431 = vmatprep.subr.bf16.mxu0 %v368
  %432 = vmatpush1.bf16.msra.mxu0 %v367
  %433 = vmatprep.subr.bf16.mxu0 %v370
  %434 = vmatpush1.bf16.msra.mxu0 %v369
  %435 = vmatprep.subr.bf16.mxu0 %v372
  %436 = vmatpush1.bf16.msra.mxu0 %v371
  %437 = vmatprep.subr.bf16.mxu0 %v374
  %438 = vmatpush1.bf16.msra.mxu0 %v373
  %439 = vmatprep.subr.bf16.mxu0 %v376
  %440 = vmatpush1.bf16.msra.mxu0 %v375
  %441 = vmatprep.subr.bf16.mxu0 %v378
  %442 = vmatpush1.bf16.msra.mxu0 %v377
  %443 = vmatprep.subr.bf16.mxu0 %v380
  %444 = vmatpush1.bf16.msra.mxu0 %v379
  %445 = vmatprep.subr.bf16.mxu0 %v382
  %446 = vmatpush1.bf16.msra.mxu0 %v381
  %447 = vmatprep.subr.bf16.mxu0 %v384
  %448 = vmatpush1.bf16.msra.mxu0 %v383
  %449 = vmatprep.subr.bf16.mxu0 %v386
  %450 = vmatpush1.bf16.msra.mxu0 %v385
  %451 = vmatprep.subr.bf16.mxu0 %v388
  %452 = vmatpush1.bf16.msra.mxu0 %v387
  %453 = vmatprep.subr.bf16.mxu0 %v390
  %454 = vmatpush1.bf16.msra.mxu0 %v389
  %455 = vmatprep.subr.bf16.mxu0 %v392
  %456 = vmatpush1.bf16.msra.mxu0 %v391
  %457 = vmatprep.mubr.bf16.mxu0 %v224
  %458 = vmatmul.mubr.bf16.gmra.mrb[0].mxu0 %v223
  %v459 = vpop.f32.mrb[0].mxu0
  %v460 = vadd.f32 %v260, %v459
  %v461 = vpop.f32.mrb[0].mxu0
  %v462 = vadd.f32 %v264, %v461
  %v463 = vpop.f32.mrb[0].mxu0
  %v464 = vpop.f32.mrb[0].mxu0
  %465 = vdwg.mxu0
  %v466 = vrot.slane %v460, 4
  %v467 = vadd.f32 %v460, %v466
  %v468 = vrot.slane %v467, 2
  %v469 = vadd.f32 %v467, %v468
  %v470 = vrot.slane %v469, 1
  %v471 = vadd.f32 %v469, %v470
  %v472 = vrot.slane %v462, 4
  %v473 = vadd.f32 %v462, %v472
  %v474 = vrot.slane %v473, 2
  %v475 = vadd.f32 %v473, %v474
  %v476 = vrot.slane %v475, 1
  %v477 = vadd.f32 %v475, %v476
  %v478 = vmul.f32 %v471, %v39
  %v479 = vmul.f32 %v477, %v39
  %v480 = vmul.f32 %v460, %v460
  %v481 = vmul.f32 %v462, %v462
  %v482 = vrot.slane %v480, 4
  %v483 = vadd.f32 %v480, %v482
  %v484 = vrot.slane %v483, 2
  %v485 = vadd.f32 %v483, %v484
  %v486 = vrot.slane %v485, 1
  %v487 = vadd.f32 %v485, %v486
  %v488 = vrot.slane %v481, 4
  %v489 = vadd.f32 %v481, %v488
  %v490 = vrot.slane %v489, 2
  %v491 = vadd.f32 %v489, %v490
  %v492 = vrot.slane %v491, 1
  %v493 = vadd.f32 %v491, %v492
  %v494 = vmul.f32 %v487, %v39
  %v495 = vmul.f32 %v493, %v39
  %v496 = vmul.f32 %v478, %v478
  %v497 = vmul.f32 %v479, %v479
  %v498 = vsub.f32 %v494, %v496
  %v499 = vsub.f32 %v495, %v497
  %v500 = vmax.f32 %v498, 0.0
  %v501 = vmax.f32 %v499, 0.0
  %v502 = vadd.f32 %v500, 1e-05
  %v503 = vadd.f32 %v501, 1e-05
  %v504 = vrsqrt.pop %v502
  %v505 = vrsqrt.pop %v503
  %v506 = vmul.f32 %v29, %v504
  %v507 = vmul.f32 %v30, %v505
  %v508 = vmul.f32 %v478, %v506
  %v509 = vmul.f32 %v479, %v507
  %v512 = vrot.slane %v508, 7
  %v513 = vrot.slane %v509, 7
  %v516 = vsub.f32 %v29, %v512
  %v517 = vsub.f32 %v30, %v513
  %v518 = vlaneseq
  %v519 = vshrl.u32 %v518, 7
  %v520 = vsub.s32 4, %v519
  %v521 = vrot.slane %v506, %v520
  %v522 = vlaneseq
  %v523 = vshrl.u32 %v522, 7
  %v524 = vsub.s32 4, %v523
  %v525 = vrot.slane %v507, %v524
  %v526 = vmul.f32 %v460, %v521
  %v527 = vmul.f32 %v462, %v525
  %v528 = vlaneseq
  %v529 = vshrl.u32 %v528, 7
  %v530 = vsub.s32 5, %v529
  %v531 = vrot.slane %v516, %v530
  %v532 = vlaneseq
  %v533 = vshrl.u32 %v532, 7
  %v534 = vsub.s32 5, %v533
  %v535 = vrot.slane %v517, %v534
  %v536 = vadd.f32 %v526, %v531
  %v537 = vadd.f32 %v527, %v535
  %v538 = vmax.f32 %v536, 0.0
  %v539 = vmax.f32 %v537, 0.0
  %v540 = vpack.c.bf16 %v538, %v538
  %v541 = vpack.c.bf16 %v539, %v539
  %v542 = vld [vmem:[%s3] sm:$0xf]
  %v543 = vld [vmem:[%s3 + $0x4] sm:$0xf]
  %v544 = vld [vmem:[%s3 + $0x8] sm:$0xf]
  %v545 = vld [vmem:[%s3 + $0xc] sm:$0xf]
  %v546 = vld [vmem:[%s3 + $0x10] sm:$0xf]
  %v547 = vld [vmem:[%s3 + $0x14] sm:$0xf]
  %v548 = vld [vmem:[%s3 + $0x18] sm:$0xf]
  %v549 = vld [vmem:[%s3 + $0x1c] sm:$0xf]
  %v550 = vld [vmem:[%s3 + $0x20] sm:$0xf]
  %v551 = vld [vmem:[%s3 + $0x24] sm:$0xf]
  %v552 = vld [vmem:[%s3 + $0x28] sm:$0xf]
  %v553 = vld [vmem:[%s3 + $0x2c] sm:$0xf]
  %v554 = vld [vmem:[%s3 + $0x30] sm:$0xf]
  %v555 = vld [vmem:[%s3 + $0x34] sm:$0xf]
  %v556 = vld [vmem:[%s3 + $0x38] sm:$0xf]
  %v557 = vld [vmem:[%s3 + $0x3c] sm:$0xf]
  %v558 = vld [vmem:[%s3 + $0x40] sm:$0xf]
  %v559 = vld [vmem:[%s3 + $0x44] sm:$0xf]
  %v560 = vld [vmem:[%s3 + $0x48] sm:$0xf]
  %v561 = vld [vmem:[%s3 + $0x4c] sm:$0xf]
  %v562 = vld [vmem:[%s3 + $0x50] sm:$0xf]
  %v563 = vld [vmem:[%s3 + $0x54] sm:$0xf]
  %v564 = vld [vmem:[%s3 + $0x58] sm:$0xf]
  %v565 = vld [vmem:[%s3 + $0x5c] sm:$0xf]
  %v566 = vld [vmem:[%s3 + $0x60] sm:$0xf]
  %v567 = vld [vmem:[%s3 + $0x64] sm:$0xf]
  %v568 = vld [vmem:[%s3 + $0x68] sm:$0xf]
  %v569 = vld [vmem:[%s3 + $0x6c] sm:$0xf]
  %v570 = vld [vmem:[%s3 + $0x70] sm:$0xf]
  %v571 = vld [vmem:[%s3 + $0x74] sm:$0xf]
  %v572 = vld [vmem:[%s3 + $0x78] sm:$0xf]
  %v573 = vld [vmem:[%s3 + $0x7c] sm:$0xf]
  %v574 = vld [vmem:[%s6] sm:$0x1]
  %v576 = vlaneseq
  %v577 = vshrl.u32 %v576, 7
  %v578 = vsub.s32 0, %v577
  %v579 = vrot.slane %v574, %v578
  %v613 = vunpack.c.l.b16 %v542
  %v614 = vunpack.c.l.b16 %v543
  %v615 = vunpack.c.l.b16 %v544
  %v616 = vunpack.c.l.b16 %v545
  %v617 = vunpack.c.l.b16 %v546
  %v618 = vunpack.c.l.b16 %v547
  %v619 = vunpack.c.l.b16 %v548
  %v620 = vunpack.c.l.b16 %v549
  %v621 = vunpack.c.l.b16 %v550
  %v622 = vunpack.c.l.b16 %v551
  %v623 = vunpack.c.l.b16 %v552
  %v624 = vunpack.c.l.b16 %v553
  %v625 = vunpack.c.l.b16 %v554
  %v626 = vunpack.c.l.b16 %v555
  %v627 = vunpack.c.l.b16 %v556
  %v628 = vunpack.c.l.b16 %v557
  %v629 = vunpack.c.l.b16 %v558
  %v630 = vunpack.c.l.b16 %v559
  %v631 = vunpack.c.l.b16 %v560
  %v632 = vunpack.c.l.b16 %v561
  %v633 = vunpack.c.l.b16 %v562
  %v634 = vunpack.c.l.b16 %v563
  %v635 = vunpack.c.l.b16 %v564
  %v636 = vunpack.c.l.b16 %v565
  %v637 = vunpack.c.l.b16 %v566
  %v638 = vunpack.c.l.b16 %v567
  %v639 = vunpack.c.l.b16 %v568
  %v640 = vunpack.c.l.b16 %v569
  %v641 = vunpack.c.l.b16 %v570
  %v642 = vunpack.c.l.b16 %v571
  %v643 = vunpack.c.l.b16 %v572
  %v644 = vunpack.c.l.b16 %v573
  %v645 = vpack.c.b16 %v614, %v613
  %v646 = vpack.c.b16 %v616, %v615
  %v647 = vpack.c.b16 %v618, %v617
  %v648 = vpack.c.b16 %v620, %v619
  %v649 = vpack.c.b16 %v622, %v621
  %v650 = vpack.c.b16 %v624, %v623
  %v651 = vpack.c.b16 %v626, %v625
  %v652 = vpack.c.b16 %v628, %v627
  %v653 = vpack.c.b16 %v630, %v629
  %v654 = vpack.c.b16 %v632, %v631
  %v655 = vpack.c.b16 %v634, %v633
  %v656 = vpack.c.b16 %v636, %v635
  %v657 = vpack.c.b16 %v638, %v637
  %v658 = vpack.c.b16 %v640, %v639
  %v659 = vpack.c.b16 %v642, %v641
  %v660 = vpack.c.b16 %v644, %v643
  %677 = vmatprep.subr.bf16.mxu0 0
  %678 = vmatpush1.bf16.msra.mxu0 %v645
  %679 = vmatprep.subr.bf16.mxu0 0
  %680 = vmatpush1.bf16.msra.mxu0 %v646
  %681 = vmatprep.subr.bf16.mxu0 0
  %682 = vmatpush1.bf16.msra.mxu0 %v647
  %683 = vmatprep.subr.bf16.mxu0 0
  %684 = vmatpush1.bf16.msra.mxu0 %v648
  %685 = vmatprep.subr.bf16.mxu0 0
  %686 = vmatpush1.bf16.msra.mxu0 %v649
  %687 = vmatprep.subr.bf16.mxu0 0
  %688 = vmatpush1.bf16.msra.mxu0 %v650
  %689 = vmatprep.subr.bf16.mxu0 0
  %690 = vmatpush1.bf16.msra.mxu0 %v651
  %691 = vmatprep.subr.bf16.mxu0 0
  %692 = vmatpush1.bf16.msra.mxu0 %v652
  %693 = vmatprep.subr.bf16.mxu0 0
  %694 = vmatpush1.bf16.msra.mxu0 %v653
  %695 = vmatprep.subr.bf16.mxu0 0
  %696 = vmatpush1.bf16.msra.mxu0 %v654
  %697 = vmatprep.subr.bf16.mxu0 0
  %698 = vmatpush1.bf16.msra.mxu0 %v655
  %699 = vmatprep.subr.bf16.mxu0 0
  %700 = vmatpush1.bf16.msra.mxu0 %v656
  %701 = vmatprep.subr.bf16.mxu0 0
  %702 = vmatpush1.bf16.msra.mxu0 %v657
  %703 = vmatprep.subr.bf16.mxu0 0
  %704 = vmatpush1.bf16.msra.mxu0 %v658
  %705 = vmatprep.subr.bf16.mxu0 0
  %706 = vmatpush1.bf16.msra.mxu0 %v659
  %707 = vmatprep.subr.bf16.mxu0 0
  %708 = vmatpush1.bf16.msra.mxu0 %v660
  %709 = vmatprep.mubr.bf16.mxu0 %v541
  %710 = vmatmul.mubr.bf16.gmra.mrb[0].mxu0 %v540
  %v711 = vpop.f32.mrb[0].mxu0
  %v712 = vadd.f32 %v579, %v711
  %v713 = vpop.f32.mrb[0].mxu0
  %v714 = vpop.f32.mrb[0].mxu0
  %v715 = vpop.f32.mrb[0].mxu0
  %716 = vdwg.mxu0
  %v717 = vtanh.pop %v712
  %vm718 = vcmask 31744
  %719 = vst.msk [vmem:[%s7] sm:$0xff] %vm718, %v717
  // Predicated region
  $region30: #{pi_network_forward.1} parent=0 // pred_check
    _
  $region31: #{pi_network_forward.1} parent=0 // pred_check_branch
    %721 = sbr.rel (0) target = $region33
  $region32: #{pi_network_forward.1} parent=0 // pred_region
    _
  $region33: #{pi_network_forward.1} parent=0 // pred_fallthru
    _
  // Predicated region
  $region34: #{pi_network_forward.1} parent=0 // pred_check
    _
  $region35: #{pi_network_forward.1} parent=0 // pred_check_branch
    %723 = sbr.rel (0) target = $region37
  $region36: #{pi_network_forward.1} parent=0 // pred_region
    _
  $region37: #{pi_network_forward.1} parent=0 // pred_fallthru
    _

</llo_original>
